<compile_context>
chip_gen: v7x
topology: tpu7x:2x2x1
jax: 0.10.0
libtpu: 0.0.40
codegen_flags: <defaults>
</compile_context>

<pallas_src>
import functools

import numpy as np
import jax
import jax.numpy as jnp
from jax import lax
from jax.experimental import pallas as pl
from jax.experimental.pallas import tpu as pltpu


# ---------------------------------------------------------------------------
# One-time capability probe: does this Mosaic build accept dynamic (traced)
# rotate amounts for pltpu.roll?  Probing once keeps every shape on the fast
# path and removes try/except from the hot call (a transient runtime failure
# would otherwise permanently demote a shape to the barrel-shifter fallback).
# ---------------------------------------------------------------------------
_DYNAMIC_ROLL_SUPPORTED = None


def _dynamic_roll_supported():
    global _DYNAMIC_ROLL_SUPPORTED
    if _DYNAMIC_ROLL_SUPPORTED is not None:
        return _DYNAMIC_ROLL_SUPPORTED

    def _probe_kernel(s_ref, x_ref, o_ref):
        t = pltpu.roll(x_ref[...], s_ref[0], axis=0)
        o_ref[...] = pltpu.roll(t, s_ref[0], axis=1)

    try:
        probe = pl.pallas_call(
            _probe_kernel,
            out_shape=jax.ShapeDtypeStruct((8, 128), jnp.float32),
            grid_spec=pltpu.PrefetchScalarGridSpec(
                num_scalar_prefetch=1,
                grid=(1,),
                in_specs=[pl.BlockSpec((8, 128), lambda i, s: (0, 0))],
                out_specs=pl.BlockSpec((8, 128), lambda i, s: (0, 0)),
            ),
        )
        jax.block_until_ready(
            jax.jit(probe)(jnp.array([3], jnp.int32),
                           jnp.zeros((8, 128), jnp.float32)))
        _DYNAMIC_ROLL_SUPPORTED = True
    except Exception:
        _DYNAMIC_ROLL_SUPPORTED = False
    return _DYNAMIC_ROLL_SUPPORTED


def _vmem_capacity_bytes():
    """Physical VMEM per TensorCore for this generation (conservative default)."""
    try:
        cap = int(getattr(pltpu.get_tpu_info(), "vmem_capacity_bytes", 0))
        if cap > 0:
            return cap
    except Exception:
        pass
    return 64 * 1024 * 1024  # v7x per-TC size; safe lower bound everywhere


def _roll_any(x, shift, axis, size, dynamic_ok):
    """roll(x, shift, axis) where `shift` is a traced int32 scalar in [0, size)."""
    if dynamic_ok:
        return pltpu.roll(x, shift, axis=axis)
    # Barrel shifter from statically-shifted rolls.  jnp.where blend: one VPU
    # vsel per vreg per step, bit-exact (NaN/inf safe) and works for int dtypes.
    step = 1
    while step < size:
        rolled = pltpu.roll(x, step, axis=axis)
        x = jnp.where((shift & step) != 0, rolled, x)
        step *= 2
    return x


def _cat_kernel(coords_ref, seg_ref, o_ref, *, H, W, dynamic_roll, upcast_narrow):
    k = pl.program_id(0)
    K = pl.num_programs(0)
    is_first = k == 0
    is_last = k == K - 1

    # ---- scalar bookkeeping (SMEM reads of the prefetched coords) ----------
    y0 = coords_ref[0, 0]
    x0 = coords_ref[0, 1]
    x1 = coords_ref[1, 1]
    yk = coords_ref[k, 0]
    xk = coords_ref[k, 1]
    xkm1 = coords_ref[jnp.maximum(k - 1, 0), 1]

    # Destination column window [dst, dst_end) in the concatenated output and
    # the source column where this segment's slice starts.
    dst = jnp.where(is_first, 0, x1 + xkm1 - x0)
    dst_end = jnp.where(is_last, W, jnp.where(is_first, x1, x1 + xk - x0))
    cstart = jnp.where(is_first, 0, x0)

    # torch .roll(diff, dims=0): cumulative y-differences telescope to yk - y0.
    # jnp "%" is floor-mod, so decreasing y-coordinates (negative diff) give the
    # same non-negative shift torch.roll / np.roll would use.
    row_shift = (yk - y0) % H
    lane_shift = (dst - cstart) % W

    # ---- data movement ------------------------------------------------------
    tile = seg_ref[...]                                   # (H, W) segment k
    if upcast_narrow:
        # Avoid packed-sublane rotates on sub-32-bit data (and bf16 VPU gaps on
        # v5e): do the rolls in a 32-bit working dtype, downcast at the store.
        work = jnp.float32 if jnp.issubdtype(o_ref.dtype, jnp.floating) else jnp.int32
        tile = tile.astype(work)
    tile = _roll_any(tile, row_shift, 0, H, dynamic_roll)   # row roll (dims=0)
    tile = _roll_any(tile, lane_shift, 1, W, dynamic_roll)  # src cols -> dst cols
    tile = tile.astype(o_ref.dtype)

    # (1, W) mask broadcast across rows — ~H/8 less mask-generation VPU work
    # than a full (H, W) iota + compares.
    col = lax.broadcasted_iota(jnp.int32, (1, W), 1)
    in_window = (col >= dst) & (col < dst_end)

    @pl.when(is_first)
    def _():
        # Fused zero-init + first write: saves one full (H, W) store and load.
        o_ref[...] = jnp.where(in_window, tile, jnp.zeros_like(tile))

    @pl.when(jnp.logical_not(is_first))
    def _():
        # Full-width unmasked store; window selection is a cheap VPU select.
        o_ref[...] = jnp.where(in_window, tile, o_ref[...])


def _build_call(K, H, W, dtype, dynamic_roll, upcast_narrow):
    kernel = functools.partial(
        _cat_kernel, H=H, W=W, dynamic_roll=dynamic_roll, upcast_narrow=upcast_narrow)

    itemsize = jnp.dtype(dtype).itemsize
    block_bytes = H * W * itemsize
    # Real footprint: double/triple-buffered (H, W) input blocks + the resident
    # (H, W) output accumulator + writeback staging + compiler scratch slack,
    # clamped to ~80% of this generation's physical VMEM (leaves headroom on
    # v7x's 64 MiB/TC; lets v5e/v6e use their 128 MiB when blocks are big).
    need = 5 * block_bytes + (2 << 20)
    cap = int(0.8 * _vmem_capacity_bytes())
    vmem_limit = int(max(min(need, cap), min(16 << 20, cap)))

    grid_spec = pltpu.PrefetchScalarGridSpec(
        num_scalar_prefetch=1,                                   # coords -> SMEM
        grid=(K,),
        # Leading dim squeezed: kernel ref is directly the (H, W) segment tile.
        in_specs=[pl.BlockSpec((None, H, W), lambda k, coords: (k, 0, 0))],
        out_specs=pl.BlockSpec((H, W), lambda k, coords: (0, 0)),
    )
    return pl.pallas_call(
        kernel,
        out_shape=jax.ShapeDtypeStruct((H, W), dtype),
        grid_spec=grid_spec,
        compiler_params=pltpu.CompilerParams(
            dimension_semantics=("arbitrary",),   # output block is an accumulator
            vmem_limit_bytes=vmem_limit,
        ),
    )


@functools.partial(jax.jit, static_argnames=("dynamic_roll", "upcast_narrow"))
def _concat_impl(coords, odo, *, dynamic_roll, upcast_narrow):
    K, H, W = odo.shape
    return _build_call(K, H, W, odo.dtype, dynamic_roll, upcast_narrow)(coords, odo)


def concat_prediction_forward(x, odo):
    """Pallas equivalent of Concat_prediction().forward(x, odo).

    x:   [K, 1, 2] (or [K, 2]) integer coordinates (row i = (y, column offset)).
    odo: [K, H, W] stacked segment outputs.
    Returns the concatenated (H, W) prediction.  Fully traceable: coordinates
    never come back to the host and one compiled kernel serves every coordinate
    value for a given shape/dtype.
    """
    odo = jnp.asarray(odo)
    if odo.ndim != 3:
        raise ValueError(f"odo must be [K, H, W], got shape {odo.shape}")
    K, H, W = odo.shape
    if K < 2:
        # The torch module indexes odo[1] unconditionally; mirror that contract
        # explicitly instead of silently reading out-of-bounds SMEM.
        raise ValueError("Concat_prediction requires at least 2 segments")
    coords = jnp.asarray(x).reshape(K, 2).astype(jnp.int32)
    upcast_narrow = jnp.dtype(odo.dtype).itemsize < 4
    return _concat_impl(coords, odo,
                        dynamic_roll=_dynamic_roll_supported(),
                        upcast_narrow=upcast_narrow)


def _reference(coords, out_np):
    """Pure-numpy transcription of the PyTorch module (correctness check)."""
    K = coords.shape[0]
    st = out_np[0][:, :int(coords[1][1])].copy()
    diff = 0
    for i in range(K - 1):
        diff += int(coords[i + 1][0] - coords[i][0])
        start = int(coords[0][1])
        end = start + int(coords[i + 1][1] - coords[i][1])
        rolled = np.roll(out_np[i + 1], diff, axis=0)
        if i == K - 2:
            st = np.concatenate(
                [st, rolled[:, start:out_np[i + 1].shape[-1] - st.shape[-1] + start]],
                axis=1)
        else:
            st = np.concatenate([st, rolled[:, start:end]], axis=1)
    return st


if __name__ == "__main__":
    key = jax.random.PRNGKey(0)

    # Small but (8, 128)-aligned shapes: K segments, H rows (roll axis), W columns.
    K, H, W = 4, 16, 256
    odo = jax.random.normal(key, (K, H, W), dtype=jnp.float32)

    # coordinate arrays x: [K, 1, 2]; row i = (y_coordinate, column_offset)
    coords_sets = [
        np.array([[[0, 32]], [[3, 96]], [[7, 160]], [[12, 224]]], dtype=np.int32),
        # decreasing y-coordinates -> negative roll diffs (exercises the floor-mod path)
        np.array([[[10, 48]], [[4, 112]], [[7, 176]], [[2, 208]]], dtype=np.int32),
    ]

    for x in coords_sets:   # the same compiled kernel serves both coordinate sets
        result = jax.block_until_ready(concat_prediction_forward(jnp.asarray(x), odo))
        ref = _reference(x.squeeze(1), np.asarray(odo))
        assert result.shape == ref.shape, (result.shape, ref.shape)
        np.testing.assert_allclose(np.asarray(result), ref, rtol=1e-6, atol=1e-6)

    # bf16 input: exercises the upcast-before-roll path (pure data movement, so
    # the result must be bit-exact against the f32 reference of the bf16 data).
    odo16 = odo.astype(jnp.bfloat16)
    res16 = jax.block_until_ready(
        concat_prediction_forward(jnp.asarray(coords_sets[0]), odo16))
    ref16 = _reference(coords_sets[0].squeeze(1),
                       np.asarray(odo16).astype(np.float32))
    np.testing.assert_allclose(np.asarray(res16).astype(np.float32), ref16,
                               rtol=0.0, atol=0.0)

    print("KERNEL_OK")
</pallas_src>

<mosaic_0001>
module attributes {stable_mosaic.version = 11 : i64} {
  func.func @_probe_kernel(%arg0: i32, %arg1: memref<1xi32, #tpu.memory_space<smem>>, %arg2: memref<8x128xf32, #tpu.memory_space<vmem>>, %arg3: memref<8x128xf32, #tpu.memory_space<vmem>>) attributes {dimension_semantics = [#tpu.dimension_semantics<arbitrary>], iteration_bounds = array<i64: 1>, scalar_prefetch = 1 : i64, scratch_operands = 0 : i64, tpu.core_type = #tpu.core_type<tc>, window_params = [{pipeline_mode = #tpu.pipeline_mode<synchronous>, transform_indices = @transform_0, window_bounds = array<i64: 8, 128>}, {pipeline_mode = #tpu.pipeline_mode<synchronous>, transform_indices = @transform_1, window_bounds = array<i64: 8, 128>}]} {
    %c0 = arith.constant 0 : index
    %c0_0 = arith.constant 0 : index
    %0 = vector.load %arg2[%c0, %c0_0] : memref<8x128xf32, #tpu.memory_space<vmem>>, vector<8x128xf32>
    %c0_1 = arith.constant 0 : index
    %1 = memref.load %arg1[%c0_1] : memref<1xi32, #tpu.memory_space<smem>>
    %2 = tpu.dynamic_rotate %0 by %1 dim 0 : vector<8x128xf32>, i32 -> vector<8x128xf32>
    %c0_2 = arith.constant 0 : index
    %3 = memref.load %arg1[%c0_2] : memref<1xi32, #tpu.memory_space<smem>>
    %4 = tpu.dynamic_rotate %2 by %3 dim 1 : vector<8x128xf32>, i32 -> vector<8x128xf32>
    %c0_3 = arith.constant 0 : index
    %c0_4 = arith.constant 0 : index
    %5 = vector.load %arg3[%c0_3, %c0_4] : memref<8x128xf32, #tpu.memory_space<vmem>>, vector<8x128xf32>
    tpu.vector_store %arg3[%c0_3, %c0_4], %4 {strides = array<i32>} : memref<8x128xf32, #tpu.memory_space<vmem>>, vector<8x128xf32>,
    return
  }
  func.func @transform_0(%arg0: i32, %arg1: memref<1xi32, #tpu.memory_space<smem>>) -> (i32, i32) {
    %c0_i32 = arith.constant 0 : i32
    %c0_i32_0 = arith.constant 0 : i32
    %c0_i32_1 = arith.constant 0 : i32
    return %c0_i32, %c0_i32_0 : i32, i32
  }
  func.func @transform_1(%arg0: i32, %arg1: memref<1xi32, #tpu.memory_space<smem>>) -> (i32, i32) {
    %c0_i32 = arith.constant 0 : i32
    %c0_i32_0 = arith.constant 0 : i32
    %c0_i32_1 = arith.constant 0 : i32
    return %c0_i32, %c0_i32_0 : i32, i32
  }
}

module attributes {stable_mosaic.version = 11 : i64} {
  func.func @_cat_kernel(%arg0: i32, %arg1: memref<4x2xi32, #tpu.memory_space<smem>>, %arg2: memref<1x16x256xf32, #tpu.memory_space<vmem>>, %arg3: memref<16x256xf32, #tpu.memory_space<vmem>>) attributes {dimension_semantics = [#tpu.dimension_semantics<arbitrary>], iteration_bounds = array<i64: 4>, scalar_prefetch = 1 : i64, scratch_operands = 0 : i64, tpu.core_type = #tpu.core_type<tc>, window_params = [{transform_indices = @transform_0, window_bounds = array<i64: 1, 16, 256>}, {pipeline_mode = #tpu.pipeline_mode<synchronous>, transform_indices = @transform_1, window_bounds = array<i64: 16, 256>}]} {
    %c0_i32 = arith.constant 0 : i32
    %0 = arith.cmpi eq, %arg0, %c0_i32 : i32
    %c3_i32 = arith.constant 3 : i32
    %1 = arith.cmpi eq, %arg0, %c3_i32 : i32
    %c0 = arith.constant 0 : index
    %c0_0 = arith.constant 0 : index
    %2 = memref.load %arg1[%c0, %c0_0] : memref<4x2xi32, #tpu.memory_space<smem>>
    %c0_1 = arith.constant 0 : index
    %c1 = arith.constant 1 : index
    %3 = memref.load %arg1[%c0_1, %c1] : memref<4x2xi32, #tpu.memory_space<smem>>
    %c1_2 = arith.constant 1 : index
    %c1_3 = arith.constant 1 : index
    %4 = memref.load %arg1[%c1_2, %c1_3] : memref<4x2xi32, #tpu.memory_space<smem>>
    %5 = arith.index_cast %arg0 : i32 to index
    %c0_4 = arith.constant 0 : index
    %6 = memref.load %arg1[%5, %c0_4] : memref<4x2xi32, #tpu.memory_space<smem>>
    %7 = arith.index_cast %arg0 : i32 to index
    %c1_5 = arith.constant 1 : index
    %8 = memref.load %arg1[%7, %c1_5] : memref<4x2xi32, #tpu.memory_space<smem>>
    %c1_i32 = arith.constant 1 : i32
    %9 = arith.subi %arg0, %c1_i32 : i32
    %c0_i32_6 = arith.constant 0 : i32
    %10 = arith.maxsi %9, %c0_i32_6 : i32
    %11 = arith.index_cast %10 : i32 to index
    %c1_7 = arith.constant 1 : index
    %12 = memref.load %arg1[%11, %c1_7] : memref<4x2xi32, #tpu.memory_space<smem>>
    %13 = arith.addi %4, %12 : i32
    %14 = arith.subi %13, %3 : i32
    %c0_i32_8 = arith.constant 0 : i32
    %15 = arith.select %0, %c0_i32_8, %14 : i32
    %16 = arith.addi %4, %8 : i32
    %17 = arith.subi %16, %3 : i32
    %18 = arith.select %0, %4, %17 : i32
    %c256_i32 = arith.constant 256 : i32
    %19 = arith.select %1, %c256_i32, %18 : i32
    %c0_i32_9 = arith.constant 0 : i32
    %20 = arith.select %0, %c0_i32_9, %3 : i32
    %21 = arith.subi %6, %2 : i32
    %c16_i32 = arith.constant 16 : i32
    %c0_i32_10 = arith.constant 0 : i32
    %22 = arith.cmpi eq, %c16_i32, %c0_i32_10 : i32
    %c1_i32_11 = arith.constant 1 : i32
    %23 = arith.select %22, %c1_i32_11, %c16_i32 : i32
    %24 = arith.remsi %21, %23 : i32
    %c0_i32_12 = arith.constant 0 : i32
    %25 = arith.cmpi ne, %24, %c0_i32_12 : i32
    %c0_i32_13 = arith.constant 0 : i32
    %26 = arith.cmpi slt, %24, %c0_i32_13 : i32
    %c0_i32_14 = arith.constant 0 : i32
    %27 = arith.cmpi slt, %23, %c0_i32_14 : i32
    %28 = arith.xori %26, %27 : i1
    %29 = arith.andi %28, %25 : i1
    %30 = arith.addi %24, %23 : i32
    %31 = arith.select %29, %30, %24 : i32
    %32 = arith.subi %15, %20 : i32
    %c256_i32_15 = arith.constant 256 : i32
    %c0_i32_16 = arith.constant 0 : i32
    %33 = arith.cmpi eq, %c256_i32_15, %c0_i32_16 : i32
    %c1_i32_17 = arith.constant 1 : i32
    %34 = arith.select %33, %c1_i32_17, %c256_i32_15 : i32
    %35 = arith.remsi %32, %34 : i32
    %c0_i32_18 = arith.constant 0 : i32
    %36 = arith.cmpi ne, %35, %c0_i32_18 : i32
    %c0_i32_19 = arith.constant 0 : i32
    %37 = arith.cmpi slt, %35, %c0_i32_19 : i32
    %c0_i32_20 = arith.constant 0 : i32
    %38 = arith.cmpi slt, %34, %c0_i32_20 : i32
    %39 = arith.xori %37, %38 : i1
    %40 = arith.andi %39, %36 : i1
    %41 = arith.addi %35, %34 : i32
    %42 = arith.select %40, %41, %35 : i32
    %c0_21 = arith.constant 0 : index
    %c0_22 = arith.constant 0 : index
    %c0_23 = arith.constant 0 : index
    %43 = vector.load %arg2[%c0_21, %c0_22, %c0_23] : memref<1x16x256xf32, #tpu.memory_space<vmem>>, vector<1x16x256xf32>
    %44 = vector.shape_cast %43 : vector<1x16x256xf32> to vector<16x256xf32>
    %c1_i32_24 = arith.constant 1 : i32
    %45 = tpu.dynamic_rotate %44 by %c1_i32_24 dim 0 : vector<16x256xf32>, i32 -> vector<16x256xf32>
    %c1_i32_25 = arith.constant 1 : i32
    %46 = arith.andi %31, %c1_i32_25 : i32
    %c0_i32_26 = arith.constant 0 : i32
    %47 = arith.cmpi ne, %46, %c0_i32_26 : i32
    %48 = arith.select %47, %45, %44 : vector<16x256xf32>
    %c2_i32 = arith.constant 2 : i32
    %49 = tpu.dynamic_rotate %48 by %c2_i32 dim 0 : vector<16x256xf32>, i32 -> vector<16x256xf32>
    %c2_i32_27 = arith.constant 2 : i32
    %50 = arith.andi %31, %c2_i32_27 : i32
    %c0_i32_28 = arith.constant 0 : i32
    %51 = arith.cmpi ne, %50, %c0_i32_28 : i32
    %52 = arith.select %51, %49, %48 : vector<16x256xf32>
    %c4_i32 = arith.constant 4 : i32
    %53 = tpu.dynamic_rotate %52 by %c4_i32 dim 0 : vector<16x256xf32>, i32 -> vector<16x256xf32>
    %c4_i32_29 = arith.constant 4 : i32
    %54 = arith.andi %31, %c4_i32_29 : i32
    %c0_i32_30 = arith.constant 0 : i32
    %55 = arith.cmpi ne, %54, %c0_i32_30 : i32
    %56 = arith.select %55, %53, %52 : vector<16x256xf32>
    %c8_i32 = arith.constant 8 : i32
    %57 = tpu.dynamic_rotate %56 by %c8_i32 dim 0 : vector<16x256xf32>, i32 -> vector<16x256xf32>
    %c8_i32_31 = arith.constant 8 : i32
    %58 = arith.andi %31, %c8_i32_31 : i32
    %c0_i32_32 = arith.constant 0 : i32
    %59 = arith.cmpi ne, %58, %c0_i32_32 : i32
    %60 = arith.select %59, %57, %56 : vector<16x256xf32>
    %c1_i32_33 = arith.constant 1 : i32
    %61 = tpu.dynamic_rotate %60 by %c1_i32_33 dim 1 : vector<16x256xf32>, i32 -> vector<16x256xf32>
    %c1_i32_34 = arith.constant 1 : i32
    %62 = arith.andi %42, %c1_i32_34 : i32
    %c0_i32_35 = arith.constant 0 : i32
    %63 = arith.cmpi ne, %62, %c0_i32_35 : i32
    %64 = arith.select %63, %61, %60 : vector<16x256xf32>
    %c2_i32_36 = arith.constant 2 : i32
    %65 = tpu.dynamic_rotate %64 by %c2_i32_36 dim 1 : vector<16x256xf32>, i32 -> vector<16x256xf32>
    %c2_i32_37 = arith.constant 2 : i32
    %66 = arith.andi %42, %c2_i32_37 : i32
    %c0_i32_38 = arith.constant 0 : i32
    %67 = arith.cmpi ne, %66, %c0_i32_38 : i32
    %68 = arith.select %67, %65, %64 : vector<16x256xf32>
    %c4_i32_39 = arith.constant 4 : i32
    %69 = tpu.dynamic_rotate %68 by %c4_i32_39 dim 1 : vector<16x256xf32>, i32 -> vector<16x256xf32>
    %c4_i32_40 = arith.constant 4 : i32
    %70 = arith.andi %42, %c4_i32_40 : i32
    %c0_i32_41 = arith.constant 0 : i32
    %71 = arith.cmpi ne, %70, %c0_i32_41 : i32
    %72 = arith.select %71, %69, %68 : vector<16x256xf32>
    %c8_i32_42 = arith.constant 8 : i32
    %73 = tpu.dynamic_rotate %72 by %c8_i32_42 dim 1 : vector<16x256xf32>, i32 -> vector<16x256xf32>
    %c8_i32_43 = arith.constant 8 : i32
    %74 = arith.andi %42, %c8_i32_43 : i32
    %c0_i32_44 = arith.constant 0 : i32
    %75 = arith.cmpi ne, %74, %c0_i32_44 : i32
    %76 = arith.select %75, %73, %72 : vector<16x256xf32>
    %c16_i32_45 = arith.constant 16 : i32
    %77 = tpu.dynamic_rotate %76 by %c16_i32_45 dim 1 : vector<16x256xf32>, i32 -> vector<16x256xf32>
    %c16_i32_46 = arith.constant 16 : i32
    %78 = arith.andi %42, %c16_i32_46 : i32
    %c0_i32_47 = arith.constant 0 : i32
    %79 = arith.cmpi ne, %78, %c0_i32_47 : i32
    %80 = arith.select %79, %77, %76 : vector<16x256xf32>
    %c32_i32 = arith.constant 32 : i32
    %81 = tpu.dynamic_rotate %80 by %c32_i32 dim 1 : vector<16x256xf32>, i32 -> vector<16x256xf32>
    %c32_i32_48 = arith.constant 32 : i32
    %82 = arith.andi %42, %c32_i32_48 : i32
    %c0_i32_49 = arith.constant 0 : i32
    %83 = arith.cmpi ne, %82, %c0_i32_49 : i32
    %84 = arith.select %83, %81, %80 : vector<16x256xf32>
    %c64_i32 = arith.constant 64 : i32
    %85 = tpu.dynamic_rotate %84 by %c64_i32 dim 1 : vector<16x256xf32>, i32 -> vector<16x256xf32>
    %c64_i32_50 = arith.constant 64 : i32
    %86 = arith.andi %42, %c64_i32_50 : i32
    %c0_i32_51 = arith.constant 0 : i32
    %87 = arith.cmpi ne, %86, %c0_i32_51 : i32
    %88 = arith.select %87, %85, %84 : vector<16x256xf32>
    %c128_i32 = arith.constant 128 : i32
    %89 = tpu.dynamic_rotate %88 by %c128_i32 dim 1 : vector<16x256xf32>, i32 -> vector<16x256xf32>
    %c128_i32_52 = arith.constant 128 : i32
    %90 = arith.andi %42, %c128_i32_52 : i32
    %c0_i32_53 = arith.constant 0 : i32
    %91 = arith.cmpi ne, %90, %c0_i32_53 : i32
    %92 = arith.select %91, %89, %88 : vector<16x256xf32>
    %93 = tpu.iota {dimensions = array<i32: 1>} : vector<1x256xi32>
    %94 = vector.broadcast %15 : i32 to vector<1x256xi32>
    %95 = arith.cmpi sge, %93, %94 : vector<1x256xi32>
    %96 = vector.broadcast %19 : i32 to vector<1x256xi32>
    %97 = arith.cmpi slt, %93, %96 : vector<1x256xi32>
    %98 = arith.andi %95, %97 : vector<1x256xi1>
    %99 = arith.extui %0 : i1 to i32
    %c0_i32_54 = arith.constant 0 : i32
    %100 = arith.cmpi ne, %99, %c0_i32_54 : i32
    scf.if %100 {
      %cst = arith.constant 0.000000e+00 : f32
      %104 = vector.broadcast %cst : f32 to vector<16x256xf32>
      %105 = vector.shape_cast %98 : vector<1x256xi1> to vector<1x256xi1>
      %106 = vector.broadcast %105 : vector<1x256xi1> to vector<16x256xi1>
      %107 = arith.select %106, %92, %104 : vector<16x256xi1>, vector<16x256xf32>
      %c0_56 = arith.constant 0 : index
      %c0_57 = arith.constant 0 : index
      %108 = vector.load %arg3[%c0_56, %c0_57] : memref<16x256xf32, #tpu.memory_space<vmem>>, vector<16x256xf32>
      tpu.vector_store %arg3[%c0_56, %c0_57], %107 {strides = array<i32>} : memref<16x256xf32, #tpu.memory_space<vmem>>, vector<16x256xf32>,
    } else {
    }
    %true = arith.constant true
    %101 = arith.xori %0, %true : i1
    %102 = arith.extui %101 : i1 to i32
    %c0_i32_55 = arith.constant 0 : i32
    %103 = arith.cmpi ne, %102, %c0_i32_55 : i32
    scf.if %103 {
      %c0_56 = arith.constant 0 : index
      %c0_57 = arith.constant 0 : index
      %104 = vector.load %arg3[%c0_56, %c0_57] : memref<16x256xf32, #tpu.memory_space<vmem>>, vector<16x256xf32>
      %105 = vector.shape_cast %98 : vector<1x256xi1> to vector<1x256xi1>
      %106 = vector.broadcast %105 : vector<1x256xi1> to vector<16x256xi1>
      %107 = arith.select %106, %92, %104 : vector<16x256xi1>, vector<16x256xf32>
      %c0_58 = arith.constant 0 : index
      %c0_59 = arith.constant 0 : index
      %108 = vector.load %arg3[%c0_58, %c0_59] : memref<16x256xf32, #tpu.memory_space<vmem>>, vector<16x256xf32>
      tpu.vector_store %arg3[%c0_58, %c0_59], %107 {strides = array<i32>} : memref<16x256xf32, #tpu.memory_space<vmem>>, vector<16x256xf32>,
    } else {
    }
    return
  }
  func.func @transform_0(%arg0: i32, %arg1: memref<4x2xi32, #tpu.memory_space<smem>>) -> (i32, i32, i32) {
    %c0_i32 = arith.constant 0 : i32
    %c0_i32_0 = arith.constant 0 : i32
    %c0_i32_1 = arith.constant 0 : i32
    return %arg0, %c0_i32, %c0_i32_0 : i32, i32, i32
  }
  func.func @transform_1(%arg0: i32, %arg1: memref<4x2xi32, #tpu.memory_space<smem>>) -> (i32, i32) {
    %c0_i32 = arith.constant 0 : i32
    %c0_i32_0 = arith.constant 0 : i32
    %c0_i32_1 = arith.constant 0 : i32
    return %c0_i32, %c0_i32_0 : i32, i32
  }
}

</mosaic_0001>

<llo_original>
// kernel: tpu_custom_call.1
$region0: #{tpu_custom_call.1}
  #allocation0 [shape = 'u32[]', space=smem, size = 0x4, offset = 0x4, fixed_abs, tag = 'smem constant byte address 0x4 - core index']
  #allocation1 [shape = 'u32[144,128]{1,0:T(1,128)}', space=vmem, size = 0x12000, scoped, tag = 'internal scratch']
  #allocation2 [shape = 's32[1]{0}', space=sflag, size = 0x4, scoped, tag = 'scoped memory for tpu_custom_call.1']
  #allocation3 [shape = 's32[1]{0:T(128)S(6)}', space=smem, size = 0x200, scoped, tag = 'prefetched SMEM operand 0']
  %s0 = inlined_call_operand.<no memory space> [shape: s32[1], index: 0, kind: input, shape index: {}]
  %s1 = inlined_call_operand.hbm [shape: f32[8,128], index: 1, kind: input, shape index: {}]
  %s2 = inlined_call_operand.hbm [shape: f32[8,128], index: 2, kind: output, shape index: {}]
  %s3 = sld [smem:[#allocation0]]
  $region18: #{tpu_custom_call.1} parent=0
    _
  %s5 = ssub.s32 1, %s3
  %s6 = scalar_select 0, %s5, %s3
  %7 = sst [smem:[#allocation3]] %s0
  $region1: #{tpu_custom_call.1} parent=0
    #allocation4 [shape = 'u8[4096]{0}', space=vmem, size = 0x1000, scoped, tag = 'input window, operand 1, single buffered']
    #allocation5 [shape = 's32[1]{0}', space=sflag, size = 0x4, scoped, tag = 'scoped memory for tpu_custom_call.1']
    #allocation6 [shape = 's32[1]{0}', space=sflag, size = 0x4, scoped, tag = 'scoped memory for tpu_custom_call.1']
    #allocation7 [shape = 'u8[4096]{0}', space=vmem, size = 0x1000, scoped, tag = 'output window, operand 0, single buffered']
    %8 = vsyncpa [#allocation5], 0
    %9 = vsyncpa [#allocation6], 0
    // Predicated region
    $region2: #{tpu_custom_call.1} parent=1 // pred_check
      _
    $region3: #{tpu_custom_call.1} parent=1 // pred_check_branch
      %11 = sbr.rel (0) target = $region5
    $region4: #{tpu_custom_call.1} parent=1 // pred_region
      %s13 = ssub.s32 128, 128
      %14 = vsyncadd [#allocation5], %s13
      %s16 = sshll.u32 [#allocation4], 4
      %s17 = int_to_ptr.vmem [resolvable:$true] %s16
      %19 = dma.hbm_to_vmem [thread:$0]  %s1, 128, %s17, [#allocation5]
    $region5: #{tpu_custom_call.1} parent=1 // pred_fallthru
      _
    // Predicated region
    $region6: #{tpu_custom_call.1} parent=1 // pred_check
      _
    $region7: #{tpu_custom_call.1} parent=1 // pred_check_branch
      %21 = sbr.rel (0) target = $region9
    $region8: #{tpu_custom_call.1} parent=1 // pred_region
      %22 = dma.done [#allocation5], 128
    $region9: #{tpu_custom_call.1} parent=1 // pred_fallthru
      _
    %v23 = vld [vmem:[#allocation4] sm:$0xff]
    %s24 = sld [smem:[#allocation3]]
    %s25 = sand.u32 %s24, 7
    %s26 = sand.u32 %s25, 7
    %s27 = ssub.s32 8, %s26
    %v28 = vstv %s27
    %v29 = vrot.slane %v23, %v28
    %s30 = sand.u32 %s24, 127
    %s31 = sand.u32 %s30, 127
    %32 = vrot.lane.b32.xlu0 %v29, %s31
    %v33 = vpop.permute.xlu0 %32
    %34 = vst [vmem:[#allocation7] sm:$0xff] %v33
    // Predicated region
    $region10: #{tpu_custom_call.1} parent=1 // pred_check
      _
    $region11: #{tpu_custom_call.1} parent=1 // pred_check_branch
      %36 = sbr.rel (0) target = $region13
    $region12: #{tpu_custom_call.1} parent=1 // pred_region
      %s38 = ssub.s32 128, 128
      %39 = vsyncadd [#allocation6], %s38
      %s41 = sshll.u32 [#allocation7], 4
      %s42 = int_to_ptr.vmem [resolvable:$true] %s41
      %44 = dma.vmem_to_hbm [thread:$0]  %s42, 128, %s2, [#allocation6]
    $region13: #{tpu_custom_call.1} parent=1 // pred_fallthru
      _
    // Predicated region
    $region14: #{tpu_custom_call.1} parent=1 // pred_check
      _
    $region15: #{tpu_custom_call.1} parent=1 // pred_check_branch
      %46 = sbr.rel (0) target = $region17
    $region16: #{tpu_custom_call.1} parent=1 // pred_region
      %47 = dma.done [#allocation6], 128
    $region17: #{tpu_custom_call.1} parent=1 // pred_fallthru
      _
    %48 = vsyncpa [#allocation5], 1
    %49 = vsyncpa [#allocation6], 1

// kernel: _concat_impl.1
$region0: #{_concat_impl.1}
  #allocation0 [shape = 'u32[]', space=smem, size = 0x4, offset = 0x4, fixed_abs, tag = 'smem constant byte address 0x4 - core index']
  #allocation1 [shape = 'u32[144,128]{1,0:T(1,128)}', space=vmem, size = 0x12000, scoped, tag = 'internal scratch']
  #allocation2 [shape = 's32[1]{0}', space=sflag, size = 0x4, scoped, tag = 'scoped memory for _concat_impl.1']
  #allocation3 [shape = 'u8[2048]{0}', space=smem, size = 0x800, scoped, tag = 'prefetched SMEM operand 0']
  %s0 = inlined_call_operand.vmem [shape: s32[4,2], index: 0, kind: input, shape index: {}]
  %s1 = inlined_call_operand.hbm [shape: f32[4,16,256], index: 1, kind: input, shape index: {}]
  %s2 = inlined_call_operand.hbm [shape: f32[16,256], index: 2, kind: output, shape index: {}]
  %s3 = sld [smem:[#allocation0]]
  $region49: #{_concat_impl.1} parent=0
    _
  %s5 = ssub.s32 1, %s3
  %s6 = scalar_select 0, %s5, %s3
  %s7 = sshll.u32 %s0, 4
  %s8 = int_to_ptr.vmem [resolvable:$true] %s7
  %10 = dma.vmem_to_smem %s8, 64, [#allocation3], [#allocation2]
  %11 = dma.done [#allocation2], 64
  %12 = sfence
  $region1: #{_concat_impl.1} parent=0
    #allocation4 [shape = 'u8[32768]{0}', space=vmem, size = 0x8000, scoped, tag = 'input window, operand 1']
    #allocation5 [shape = 's32[2]{0}', space=sflag, size = 0x8, scoped, tag = 'scoped memory for _concat_impl.1']
    #allocation6 [shape = 's32[2]{0}', space=sflag, size = 0x8, scoped, tag = 'scoped memory for _concat_impl.1']
    #allocation7 [shape = 'u8[16384]{0}', space=vmem, size = 0x4000, scoped, tag = 'output window, operand 0, single buffered']
    %13 = vsyncpa [#allocation5], 0
    %s14 = scalar_lea.sflag [#allocation5], 1
    %15 = vsyncpa %s14, 0
    %16 = vsyncpa [#allocation6], 0
    loop: start=0, step=1, limit=6
    $region2: #{_concat_impl.1} parent=1 // loop_pre_header
      _
    $region3: #{_concat_impl.1} parent=1 // loop_header
      %s18 = sphi 0, %s22
      %p19 = scmp.ge.s32.totalorder %s18, 6
      %s28 = sphi 0, %s30
      %s31 = sphi 0, %s28
      %s32 = sphi 0, %s31
      %s48 = sphi 0, %s32
      %s52 = sphi 0, %s52
      %s54 = sphi 0, %s52
      %s55 = sphi 0, %s54
      %s69 = sphi 0, %s55
    $region4: #{_concat_impl.1} parent=1 // loop_header_branch
      %21 = sbr.rel (%p19) target = $region8
    $region5: #{_concat_impl.1} parent=1 // loop_body
      %s23 = ssub.s32 %s18, 1
      %s24 = ssub.s32 %s18, 2
      %s25 = sadd.s32 %s18, 1
      %s26 = ssub.s32 %s18, %s25
      %p27 = scmp.eq.s32.totalorder %s26, 0
      %s29 = sadd.s32 %s28, 1
      %s30 = scalar_select %p27, %s28, %s29
      %p33 = pneg %p27
      %p34 = scmp.eq.s32.totalorder %s18, 3
      %p35 = por %p33, %p34
      %p36 = scmp.ne.s32.totalorder %s28, %s31
      %p37 = scmp.eq.s32.totalorder %s18, 0
      %p38 = por %p36, %p37
      %p39 = scmp.ne.s32.totalorder %s28, %s31
      %p40 = scmp.eq.s32.totalorder %s23, 3
      %p41 = por %p39, %p40
      %p42 = scmp.ne.s32.totalorder %s31, %s32
      %p43 = scmp.eq.s32.totalorder %s23, 0
      %p44 = por %p42, %p43
      %p45 = scmp.ne.s32.totalorder %s31, %s32
      %p46 = scmp.eq.s32.totalorder %s24, 3
      %p47 = por %p45, %p46
      %p49 = scmp.ne.s32.totalorder %s32, %s48
      %p50 = scmp.eq.s32.totalorder %s24, 0
      %p51 = por %p49, %p50
      %s53 = sadd.s32 %s52, 1
      %p56 = scmp.eq.s32.totalorder %s18, 3
      %p57 = scmp.ne.s32.totalorder %s52, %s54
      %p58 = scmp.eq.s32.totalorder %s18, 0
      %p59 = por %p57, %p58
      %p60 = scmp.ne.s32.totalorder %s52, %s54
      %p61 = scmp.eq.s32.totalorder %s23, 3
      %p62 = por %p60, %p61
      %p63 = scmp.ne.s32.totalorder %s54, %s55
      %p64 = scmp.eq.s32.totalorder %s23, 0
      %p65 = por %p63, %p64
      %p66 = scmp.ne.s32.totalorder %s54, %s55
      %p67 = scmp.eq.s32.totalorder %s24, 3
      %p68 = por %p66, %p67
      %p70 = scmp.ne.s32.totalorder %s55, %s69
      %p71 = scmp.eq.s32.totalorder %s24, 0
      %p72 = por %p70, %p71
      %p73 = scmp.le.s32.totalorder 1, %s18
      %p74 = scmp.lt.s32.totalorder %s18, 5
      %p75 = pnand %p73, %p74
      %p76 = pneg %p75
      // Predicated region
      $region9: #{_concat_impl.1} parent=5 // pred_check
        _
      $region10: #{_concat_impl.1} parent=5 // pred_check_branch
        %78 = sbr.rel (%p75) target = $region12
      $region11: #{_concat_impl.1} parent=5 // pred_region
        %s79 = ssub.s32 %s18, 1
      $region12: #{_concat_impl.1} parent=5 // pred_fallthru
        _
      %p80 = scmp.lt.s32.totalorder %s18, 4
      // Predicated region
      $region13: #{_concat_impl.1} parent=5 // pred_check
        %p81 = pneg %p80
      $region14: #{_concat_impl.1} parent=5 // pred_check_branch
        %83 = sbr.rel (%p81) target = $region16
      $region15: #{_concat_impl.1} parent=5 // pred_region
        // Predicated region
        $region17: #{_concat_impl.1} parent=15 // pred_check
          %p84 = pneg %p38
        $region18: #{_concat_impl.1} parent=15 // pred_check_branch
          %86 = sbr.rel (%p84) target = $region20
        $region19: #{_concat_impl.1} parent=15 // pred_region
          %s87 = sand.u32 %s28, 1
          %s88 = scalar_lea.sflag [#allocation5], %s87
          %s89 = sand.u32 %s28, 1
          %s90 = smul.addr %s89, 32
          %s91 = scalar_lea.vmem [#allocation4], %s90
          %s93 = ssub.s32 512, 512
          %94 = vsyncadd %s88, %s93
          %s95 = smul.addr %s18, 4
          %s96 = smul.addr %s95, 128
          %s97 = scalar_lea.hbm %s1, %s96
          %s98 = sshll.u32 %s91, 4
          %s99 = int_to_ptr.vmem [resolvable:$true] %s98
          %104 = dma.hbm_to_vmem [thread:$0]  %s97, 512, %s99, %s88, 256, 256, 16
        $region20: #{_concat_impl.1} parent=15 // pred_fallthru
          _
      $region16: #{_concat_impl.1} parent=5 // pred_fallthru
        _
      %p105 = scmp.le.s32.totalorder 1, %s18
      %p106 = scmp.lt.s32.totalorder %s18, 5
      %p107 = pnand %p105, %p106
      %p108 = pneg %p107
      // Predicated region
      $region21: #{_concat_impl.1} parent=5 // pred_check
        _
      $region22: #{_concat_impl.1} parent=5 // pred_check_branch
        %110 = sbr.rel (%p107) target = $region24
      $region23: #{_concat_impl.1} parent=5 // pred_region
        %s111 = ssub.s32 %s18, 1
        %s112 = sand.u32 %s31, 1
        %s113 = scalar_lea.sflag [#allocation5], %s112
        %s114 = sand.u32 %s31, 1
        %s115 = smul.addr %s114, 32
        %s116 = scalar_lea.vmem [#allocation4], %s115
        // Predicated region
        $region25: #{_concat_impl.1} parent=23 // pred_check
          %p117 = pneg %p44
        $region26: #{_concat_impl.1} parent=23 // pred_check_branch
          %119 = sbr.rel (%p117) target = $region28
        $region27: #{_concat_impl.1} parent=23 // pred_region
          %120 = dma.done %s113, 512
        $region28: #{_concat_impl.1} parent=23 // pred_fallthru
          _
        %s121 = sand.u32 %s31, 1
        %s122 = scalar_lea.sflag [#allocation5], %s121
        %s123 = sand.u32 %s31, 1
        %s124 = smul.addr %s123, 32
        %s125 = scalar_lea.vmem [#allocation4], %s124
        %p126 = pneg %p44
        %p127 = pneg %p41
        %p128 = pneg %p65
        %p129 = pneg %p62
        %p130 = scmp.eq.s32.totalorder %s23, 0
        %p131 = scmp.eq.s32.totalorder %s23, 3
        %s132 = sld [smem:[#allocation3]]
        %s133 = sld [smem:[#allocation3 + $0x1]]
        %s134 = sld [smem:[#allocation3 + $0x81]]
        %s135 = smul.u32 %s23, 128
        %s136 = sld [smem:[#allocation3 + %s135]]
        %s137 = sadd.s32 %s135, 1
        %s138 = sld [smem:[#allocation3 + %s137]]
        %s139 = ssub.s32 %s23, 1
        %p140 = scmp.gt.s32.totalorder %s139, 0
        %s141 = scalar_select %p140, %s139, 0
        %s142 = smul.u32 %s141, 128
        %s143 = sadd.s32 %s142, 1
        %s144 = sld [smem:[#allocation3 + %s143]]
        %s145 = sadd.s32 %s134, %s144
        %s146 = ssub.s32 %s145, %s133
        %s147 = scalar_select %p130, 0, %s146
        %s148 = sadd.s32 %s134, %s138
        %s149 = ssub.s32 %s148, %s133
        %s150 = scalar_select %p130, %s134, %s149
        %s151 = scalar_select %p131, 256, %s150
        %s152 = scalar_select %p130, 0, %s133
        %s153 = ssub.s32 %s136, %s132
        %p154 = scmp.lt.s32.totalorder %s153, 0
        %s155 = ssub.s32 0, %s153
        %s156 = scalar_select %p154, %s155, %s153
        %s157 = sand.u32 %s156, 15
        %s158 = ssub.s32 0, %s157
        %s159 = scalar_select %p154, %s158, %s157
        %p160 = scmp.ne.s32.totalorder %s159, 0
        %p161 = scmp.lt.s32.totalorder %s159, 0
        %p162 = pnand %p161, %p160
        %p163 = pneg %p162
        %s164 = sadd.s32 %s159, 16
        %s165 = scalar_select %p163, %s164, %s159
        %s166 = ssub.s32 %s147, %s152
        %p167 = scmp.lt.s32.totalorder %s166, 0
        %s168 = ssub.s32 0, %s166
        %s169 = scalar_select %p167, %s168, %s166
        %s170 = sand.u32 %s169, 255
        %s171 = ssub.s32 0, %s170
        %s172 = scalar_select %p167, %s171, %s170
        %p173 = scmp.ne.s32.totalorder %s172, 0
        %p174 = scmp.lt.s32.totalorder %s172, 0
        %p175 = pnand %p174, %p173
        %p176 = pneg %p175
        %s177 = sadd.s32 %s172, 256
        %s178 = scalar_select %p176, %s177, %s172
        %v179 = vld [vmem:[%s116] sm:$0xff]
        %v180 = vld [vmem:[%s116 + $0x8] sm:$0xff]
        %v181 = vld [vmem:[%s116 + $0x10] sm:$0xff]
        %v182 = vld [vmem:[%s116 + $0x18] sm:$0xff]
        %v183 = vrot.slane %v179, 7
        %v184 = vrot.slane %v180, 7
        %v185 = vrot.slane %v181, 7
        %v186 = vrot.slane %v182, 7
        %v187 = vlaneseq
        %v188 = vshrl.u32 %v187, 7
        %vm189 = vcmp.lt.s32.totalorder %v188, 1
        %v190 = vsel %vm189, %v183, %v185
        %v191 = vsel %vm189, %v184, %v186
        %v192 = vsel %vm189, %v185, %v183
        %v193 = vsel %vm189, %v186, %v184
        %s194 = sand.u32 %s165, 1
        %p195 = scmp.ne.s32.totalorder %s194, 0
        %s196 = scalar_select %p195, 1, 0
        %v197 = vstv %s196
        %vm198 = vcmp.eq.s32.totalorder %v197, 1
        %v199 = vsel %vm198, %v192, %v179
        %v200 = vsel %vm198, %v193, %v180
        %v201 = vsel %vm198, %v190, %v181
        %v202 = vsel %vm198, %v191, %v182
        %v203 = vrot.slane %v199, 6
        %v204 = vrot.slane %v200, 6
        %v205 = vrot.slane %v201, 6
        %v206 = vrot.slane %v202, 6
        %vm207 = vcmp.lt.s32.totalorder %v188, 2
        %v208 = vsel %vm207, %v203, %v205
        %v209 = vsel %vm207, %v204, %v206
        %v210 = vsel %vm207, %v205, %v203
        %v211 = vsel %vm207, %v206, %v204
        %s212 = sand.u32 %s165, 2
        %p213 = scmp.ne.s32.totalorder %s212, 0
        %s214 = scalar_select %p213, 1, 0
        %v215 = vstv %s214
        %vm216 = vcmp.eq.s32.totalorder %v215, 1
        %v217 = vsel %vm216, %v210, %v199
        %v218 = vsel %vm216, %v211, %v200
        %v219 = vsel %vm216, %v208, %v201
        %v220 = vsel %vm216, %v209, %v202
        %v221 = vrot.slane %v217, 4
        %v222 = vrot.slane %v218, 4
        %v223 = vrot.slane %v219, 4
        %v224 = vrot.slane %v220, 4
        %vm225 = vcmp.lt.s32.totalorder %v188, 4
        %v226 = vsel %vm225, %v221, %v223
        %v227 = vsel %vm225, %v222, %v224
        %v228 = vsel %vm225, %v223, %v221
        %v229 = vsel %vm225, %v224, %v222
        %s230 = sand.u32 %s165, 4
        %p231 = scmp.ne.s32.totalorder %s230, 0
        %s232 = scalar_select %p231, 1, 0
        %v233 = vstv %s232
        %vm234 = vcmp.eq.s32.totalorder %v233, 1
        %v235 = vsel %vm234, %v228, %v217
        %v236 = vsel %vm234, %v229, %v218
        %v237 = vsel %vm234, %v226, %v219
        %v238 = vsel %vm234, %v227, %v220
        %s239 = sand.u32 %s165, 8
        %p240 = scmp.ne.s32.totalorder %s239, 0
        %s241 = scalar_select %p240, 1, 0
        %v242 = vstv %s241
        %vm243 = vcmp.eq.s32.totalorder %v242, 1
        %v244 = vsel %vm243, %v237, %v235
        %v245 = vsel %vm243, %v238, %v236
        %v246 = vsel %vm243, %v235, %v237
        %v247 = vsel %vm243, %v236, %v238
        %248 = vrot.lane.b32.xlu0 %v244, 1
        %v249 = vpop.permute.xlu0 %248
        %250 = vrot.lane.b32.xlu0 %v246, 1
        %v251 = vpop.permute.xlu0 %250
        %252 = vrot.lane.b32.xlu0 %v245, 1
        %v253 = vpop.permute.xlu0 %252
        %254 = vrot.lane.b32.xlu0 %v247, 1
        %v255 = vpop.permute.xlu0 %254
        %v256 = vlaneseq
        %v257 = vand.u32 %v256, 127
        %vm258 = vcmp.lt.s32.totalorder %v257, 1
        %v259 = vsel %vm258, %v249, %v253
        %v260 = vsel %vm258, %v251, %v255
        %v261 = vsel %vm258, %v253, %v249
        %v262 = vsel %vm258, %v255, %v251
        %s263 = sand.u32 %s178, 1
        %p264 = scmp.ne.s32.totalorder %s263, 0
        %s265 = scalar_select %p264, 1, 0
        %v266 = vstv %s265
        %vm267 = vcmp.eq.s32.totalorder %v266, 1
        %v268 = vsel %vm267, %v261, %v244
        %v269 = vsel %vm267, %v259, %v245
        %v270 = vsel %vm267, %v262, %v246
        %v271 = vsel %vm267, %v260, %v247
        %272 = vrot.lane.b32.xlu0 %v268, 2
        %v273 = vpop.permute.xlu0 %272
        %274 = vrot.lane.b32.xlu0 %v270, 2
        %v275 = vpop.permute.xlu0 %274
        %276 = vrot.lane.b32.xlu0 %v269, 2
        %v277 = vpop.permute.xlu0 %276
        %278 = vrot.lane.b32.xlu0 %v271, 2
        %v279 = vpop.permute.xlu0 %278
        %vm280 = vcmp.lt.s32.totalorder %v257, 2
        %v281 = vsel %vm280, %v273, %v277
        %v282 = vsel %vm280, %v275, %v279
        %v283 = vsel %vm280, %v277, %v273
        %v284 = vsel %vm280, %v279, %v275
        %s285 = sand.u32 %s178, 2
        %p286 = scmp.ne.s32.totalorder %s285, 0
        %s287 = scalar_select %p286, 1, 0
        %v288 = vstv %s287
        %vm289 = vcmp.eq.s32.totalorder %v288, 1
        %v290 = vsel %vm289, %v283, %v268
        %v291 = vsel %vm289, %v281, %v269
        %v292 = vsel %vm289, %v284, %v270
        %v293 = vsel %vm289, %v282, %v271
        %294 = vrot.lane.b32.xlu0 %v290, 4
        %v295 = vpop.permute.xlu0 %294
        %296 = vrot.lane.b32.xlu0 %v292, 4
        %v297 = vpop.permute.xlu0 %296
        %298 = vrot.lane.b32.xlu0 %v291, 4
        %v299 = vpop.permute.xlu0 %298
        %300 = vrot.lane.b32.xlu0 %v293, 4
        %v301 = vpop.permute.xlu0 %300
        %vm302 = vcmp.lt.s32.totalorder %v257, 4
        %v303 = vsel %vm302, %v295, %v299
        %v304 = vsel %vm302, %v297, %v301
        %v305 = vsel %vm302, %v299, %v295
        %v306 = vsel %vm302, %v301, %v297
        %s307 = sand.u32 %s178, 4
        %p308 = scmp.ne.s32.totalorder %s307, 0
        %s309 = scalar_select %p308, 1, 0
        %v310 = vstv %s309
        %vm311 = vcmp.eq.s32.totalorder %v310, 1
        %v312 = vsel %vm311, %v305, %v290
        %v313 = vsel %vm311, %v303, %v291
        %v314 = vsel %vm311, %v306, %v292
        %v315 = vsel %vm311, %v304, %v293
        %316 = vrot.lane.b32.xlu0 %v312, 8
        %v317 = vpop.permute.xlu0 %316
        %318 = vrot.lane.b32.xlu0 %v314, 8
        %v319 = vpop.permute.xlu0 %318
        %320 = vrot.lane.b32.xlu0 %v313, 8
        %v321 = vpop.permute.xlu0 %320
        %322 = vrot.lane.b32.xlu0 %v315, 8
        %v323 = vpop.permute.xlu0 %322
        %vm324 = vcmp.lt.s32.totalorder %v257, 8
        %v325 = vsel %vm324, %v317, %v321
        %v326 = vsel %vm324, %v319, %v323
        %v327 = vsel %vm324, %v321, %v317
        %v328 = vsel %vm324, %v323, %v319
        %s329 = sand.u32 %s178, 8
        %p330 = scmp.ne.s32.totalorder %s329, 0
        %s331 = scalar_select %p330, 1, 0
        %v332 = vstv %s331
        %vm333 = vcmp.eq.s32.totalorder %v332, 1
        %v334 = vsel %vm333, %v327, %v312
        %v335 = vsel %vm333, %v325, %v313
        %v336 = vsel %vm333, %v328, %v314
        %v337 = vsel %vm333, %v326, %v315
        %338 = vrot.lane.b32.xlu0 %v334, 16
        %v339 = vpop.permute.xlu0 %338
        %340 = vrot.lane.b32.xlu0 %v336, 16
        %v341 = vpop.permute.xlu0 %340
        %342 = vrot.lane.b32.xlu0 %v335, 16
        %v343 = vpop.permute.xlu0 %342
        %344 = vrot.lane.b32.xlu0 %v337, 16
        %v345 = vpop.permute.xlu0 %344
        %vm346 = vcmp.lt.s32.totalorder %v257, 16
        %v347 = vsel %vm346, %v339, %v343
        %v348 = vsel %vm346, %v341, %v345
        %v349 = vsel %vm346, %v343, %v339
        %v350 = vsel %vm346, %v345, %v341
        %s351 = sand.u32 %s178, 16
        %p352 = scmp.ne.s32.totalorder %s351, 0
        %s353 = scalar_select %p352, 1, 0
        %v354 = vstv %s353
        %vm355 = vcmp.eq.s32.totalorder %v354, 1
        %v356 = vsel %vm355, %v349, %v334
        %v357 = vsel %vm355, %v347, %v335
        %v358 = vsel %vm355, %v350, %v336
        %v359 = vsel %vm355, %v348, %v337
        %360 = vrot.lane.b32.xlu0 %v356, 32
        %v361 = vpop.permute.xlu0 %360
        %362 = vrot.lane.b32.xlu0 %v358, 32
        %v363 = vpop.permute.xlu0 %362
        %364 = vrot.lane.b32.xlu0 %v357, 32
        %v365 = vpop.permute.xlu0 %364
        %366 = vrot.lane.b32.xlu0 %v359, 32
        %v367 = vpop.permute.xlu0 %366
        %vm368 = vcmp.lt.s32.totalorder %v257, 32
        %v369 = vsel %vm368, %v361, %v365
        %v370 = vsel %vm368, %v363, %v367
        %v371 = vsel %vm368, %v365, %v361
        %v372 = vsel %vm368, %v367, %v363
        %s373 = sand.u32 %s178, 32
        %p374 = scmp.ne.s32.totalorder %s373, 0
        %s375 = scalar_select %p374, 1, 0
        %v376 = vstv %s375
        %vm377 = vcmp.eq.s32.totalorder %v376, 1
        %v378 = vsel %vm377, %v371, %v356
        %v379 = vsel %vm377, %v369, %v357
        %v380 = vsel %vm377, %v372, %v358
        %v381 = vsel %vm377, %v370, %v359
        %382 = vrot.lane.b32.xlu0 %v378, 64
        %v383 = vpop.permute.xlu0 %382
        %384 = vrot.lane.b32.xlu0 %v380, 64
        %v385 = vpop.permute.xlu0 %384
        %386 = vrot.lane.b32.xlu0 %v379, 64
        %v387 = vpop.permute.xlu0 %386
        %388 = vrot.lane.b32.xlu0 %v381, 64
        %v389 = vpop.permute.xlu0 %388
        %vm390 = vcmp.lt.s32.totalorder %v257, 64
        %v391 = vsel %vm390, %v383, %v387
        %v392 = vsel %vm390, %v385, %v389
        %v393 = vsel %vm390, %v387, %v383
        %v394 = vsel %vm390, %v389, %v385
        %s395 = sand.u32 %s178, 64
        %p396 = scmp.ne.s32.totalorder %s395, 0
        %s397 = scalar_select %p396, 1, 0
        %v398 = vstv %s397
        %vm399 = vcmp.eq.s32.totalorder %v398, 1
        %v400 = vsel %vm399, %v393, %v378
        %v401 = vsel %vm399, %v391, %v379
        %v402 = vsel %vm399, %v394, %v380
        %v403 = vsel %vm399, %v392, %v381
        %s404 = sand.u32 %s178, 128
        %p405 = scmp.ne.s32.totalorder %s404, 0
        %s406 = scalar_select %p405, 1, 0
        %v407 = vstv %s406
        %vm408 = vcmp.eq.s32.totalorder %v407, 1
        %v409 = vsel %vm408, %v401, %v400
        %v410 = vsel %vm408, %v400, %v401
        %v411 = vsel %vm408, %v403, %v402
        %v412 = vsel %vm408, %v402, %v403
        %v413 = vadd.s32 %v257, 128
        %v414 = vstv %s147
        %vm415 = vcmp.ge.s32.totalorder %v257, %v414
        %vm416 = vcmp.ge.s32.totalorder %v413, %v414
        %v417 = vstv %s151
        %vm418 = vcmp.lt.s32.totalorder %v257, %v417
        %vm419 = vcmp.lt.s32.totalorder %v413, %v417
        %vm420 = vmand %vm415, %vm418
        %vm421 = vmand %vm416, %vm419
        // Predicated region
        $region29: #{_concat_impl.1} parent=23 // pred_check
          %p422 = pneg %p130
        $region30: #{_concat_impl.1} parent=23 // pred_check_branch
          %424 = sbr.rel (%p422) target = $region32
        $region31: #{_concat_impl.1} parent=23 // pred_region
          %v425 = vsel %vm420, 1, 0
          %v426 = vsel %vm421, 1, 0
          %vm427 = vcmp.eq.s32.totalorder %v425, 1
          %vm428 = vcmp.eq.s32.totalorder %v426, 1
          %v429 = vsel %vm427, %v409, 0.0
          %v430 = vsel %vm428, %v410, 0.0
          %v431 = vsel %vm427, %v411, 0.0
          %v432 = vsel %vm428, %v412, 0.0
          %433 = vst [vmem:[#allocation7] sm:$0xff] %v429
          %434 = vst [vmem:[#allocation7 + $0x8] sm:$0xff] %v430
          %435 = vst [vmem:[#allocation7 + $0x10] sm:$0xff] %v431
          %436 = vst [vmem:[#allocation7 + $0x18] sm:$0xff] %v432
        $region32: #{_concat_impl.1} parent=23 // pred_fallthru
          _
        %p437 = scmp.ne.s32.totalorder %s23, 0
        // Predicated region
        $region33: #{_concat_impl.1} parent=23 // pred_check
          %p438 = pneg %p437
        $region34: #{_concat_impl.1} parent=23 // pred_check_branch
          %440 = sbr.rel (%p438) target = $region36
        $region35: #{_concat_impl.1} parent=23 // pred_region
          %v441 = vld [vmem:[#allocation7] sm:$0xff]
          %v442 = vld [vmem:[#allocation7 + $0x8] sm:$0xff]
          %v443 = vld [vmem:[#allocation7 + $0x10] sm:$0xff]
          %v444 = vld [vmem:[#allocation7 + $0x18] sm:$0xff]
          %v445 = vsel %vm420, 1, 0
          %v446 = vsel %vm421, 1, 0
          %vm447 = vcmp.eq.s32.totalorder %v445, 1
          %vm448 = vcmp.eq.s32.totalorder %v446, 1
          %v449 = vsel %vm447, %v409, %v441
          %v450 = vsel %vm448, %v410, %v442
          %v451 = vsel %vm447, %v411, %v443
          %v452 = vsel %vm448, %v412, %v444
          %453 = vst [vmem:[#allocation7] sm:$0xff] %v449
          %454 = vst [vmem:[#allocation7 + $0x8] sm:$0xff] %v450
          %455 = vst [vmem:[#allocation7 + $0x10] sm:$0xff] %v451
          %456 = vst [vmem:[#allocation7 + $0x18] sm:$0xff] %v452
        $region36: #{_concat_impl.1} parent=23 // pred_fallthru
          _
        // Predicated region
        $region37: #{_concat_impl.1} parent=23 // pred_check
          %p457 = pneg %p62
        $region38: #{_concat_impl.1} parent=23 // pred_check_branch
          %459 = sbr.rel (%p457) target = $region40
        $region39: #{_concat_impl.1} parent=23 // pred_region
          %s461 = ssub.s32 512, 512
          %462 = vsyncadd [#allocation6], %s461
          %s463 = sshll.u32 [#allocation7], 4
          %s464 = int_to_ptr.vmem [resolvable:$true] %s463
          %469 = dma.vmem_to_hbm [thread:$0]  %s464, 512, %s2, [#allocation6], 256, 256, 16
        $region40: #{_concat_impl.1} parent=23 // pred_fallthru
          _
        // Predicated region
        $region41: #{_concat_impl.1} parent=23 // pred_check
          %p470 = pneg %p62
        $region42: #{_concat_impl.1} parent=23 // pred_check_branch
          %472 = sbr.rel (%p470) target = $region44
        $region43: #{_concat_impl.1} parent=23 // pred_region
          %473 = dma.done [#allocation6], 512
        $region44: #{_concat_impl.1} parent=23 // pred_fallthru
          _
      $region24: #{_concat_impl.1} parent=5 // pred_fallthru
        _
      %p474 = scmp.le.s32.totalorder 2, %s18
      // Predicated region
      $region45: #{_concat_impl.1} parent=5 // pred_check
        %p475 = pneg %p474
      $region46: #{_concat_impl.1} parent=5 // pred_check_branch
        %477 = sbr.rel (%p475) target = $region48
      $region47: #{_concat_impl.1} parent=5 // pred_region
        %s478 = ssub.s32 %s18, 2
      $region48: #{_concat_impl.1} parent=5 // pred_fallthru
        _
    $region6: #{_concat_impl.1} parent=1 // loop_footer
      %s22 = sadd.s32 1, %s18
    $region7: #{_concat_impl.1} parent=1 // loop_footer_branch
      %17 = sbr.rel target = $region3
    $region8: #{_concat_impl.1} parent=1 // loop_exit
      _
    %479 = vsyncpa [#allocation5], 1
    %s480 = scalar_lea.sflag [#allocation5], 1
    %481 = vsyncpa %s480, 1
    %482 = vsyncpa [#allocation6], 1
    %s483 = scalar_lea.sflag [#allocation6], 1
    %484 = vsyncpa %s483, 1

</llo_original>
